<compile_context>
chip_gen: v6e
topology: v6e:2x2x1
jax: 0.10.0
libtpu: 0.0.40
codegen_flags: <defaults>
</compile_context>

<pallas_src>
import functools

import jax
import jax.numpy as jnp
from jax.experimental import pallas as pl
from jax.experimental.pallas import tpu as pltpu


def _round_up(x, m):
    return -(-x // m) * m


def _mv_var_kernel(w_ref, x_ref, out_ref, *, ppy, t, n):
    """Annualized portfolio variance w @ cov @ w^T for one batch tile.

    w_ref:   (TB, N)    f32 portfolio weights
    x_ref:   (TB, N, T) historical returns (native dtype; upcast per slice)
    out_ref: (TB, 1)    f32 annualized variance per portfolio
    """
    # s_t = sum_n w_n * x_{n,t}, accumulated slice-by-slice over the small,
    # static asset axis so the (TB, N, T) product is never materialized.
    # TODO(synk): for large N (hundreds of assets) route the projection
    #             through the MXU via a batched einsum instead of this loop.
    s = w_ref[:, 0:1] * x_ref[:, 0, :].astype(jnp.float32)            # (TB, T)
    for i in range(1, n):
        s = s + w_ref[:, i:i + 1] * x_ref[:, i, :].astype(jnp.float32)

    # Exact quadratic-form identity (no N x N covariance is ever built):
    #   w @ cov @ w^T = ppy/(T-1) * sum_t (s_t - mean_t(s))^2
    # Explicit centering is kept for f32 numerical safety.
    sc = s - jnp.mean(s, axis=1, keepdims=True)
    out_ref[...] = jnp.sum(sc * sc, axis=1, keepdims=True) * (ppy / (t - 1))


def _vmem_limit_bytes():
    """Scoped-VMEM limit: half of physical VMEM, capped at 64 MiB.

    -> 64 MiB on v5e/v6e (128 MiB physical), 32 MiB on v7x (64 MiB physical).
    Falls back to a v7x-safe 32 MiB if the hardware query is unavailable.
    """
    try:
        cap = int(pltpu.get_tpu_info().vmem_capacity_bytes)
        return min(cap // 2, 64 * 1024 * 1024)
    except Exception:
        return 32 * 1024 * 1024


def _choose_batch_tile(B, N, T, x_itemsize, budget_bytes):
    """Largest batch tile whose *padded* double-buffered VMEM footprint fits.

    Accounts for (8,128) VMEM tiling: each batch element's (N, T) slice pads
    to ceil(N / (8*pack)) x ceil(T / 128) tiles; (TB, N) weights and (TB, 1)
    outputs pad their lane dim to 128.
    """
    pack = max(1, 4 // max(1, x_itemsize))               # sublane packing factor
    x_pad = _round_up(N, 8 * pack) * _round_up(T, 128) * x_itemsize
    w_pad = _round_up(N, 128) * 4                        # f32 weights, per element
    o_pad = 128 * 4                                      # f32 output, per element
    tmp_pad = 3 * _round_up(T, 128) * 4                  # s, centered s, live slice
    per_elem = 2 * (x_pad + w_pad + o_pad) + tmp_pad     # double-buffered I/O + temps
    max_tb = max(1, budget_bytes // per_elem)
    if max_tb >= B:
        return B                                         # single tile, no padding
    return max(8, (int(max_tb) // 8) * 8)                # (8,128)-friendly block dim


def mean_variance_loss(returns, weights, batch_x,
                       risk_aversion=1.0, periods_per_year=252):
    """Negative annualized mean-variance objective, averaged over the batch."""
    B, N, T = batch_x.shape
    assert T > 1, "need at least two historical periods for a sample covariance"
    ppy = float(periods_per_year)
    ra = float(risk_aversion)

    returns = returns.astype(jnp.float32)                # tiny (B, N)
    weights = weights.astype(jnp.float32)                # tiny (B, N)
    # batch_x streams in its native dtype; slices are upcast inside the kernel.

    # Annualized portfolio return is O(B*N): keep it in XLA and drop `returns`
    # from the kernel entirely (one fewer padded input stream + DMA per step).
    pr = jnp.sum(returns * weights, axis=1) * ppy        # (B,)

    vmem_limit = _vmem_limit_bytes()
    tb = _choose_batch_tile(B, N, T, batch_x.dtype.itemsize,
                            int(0.75 * vmem_limit))
    num_tiles = -(-B // tb)
    b_pad = num_tiles * tb

    w_in, x_in = weights, batch_x
    if b_pad != B:
        # Zero-padded weights give pv == 0 for padded rows; they are sliced
        # off below, so padding never affects the result.
        # TODO(synk): process the ragged last tile with a separate tail call
        #             instead of padding batch_x (saves one HBM round trip of
        #             the big array when B % tb != 0).
        pad = b_pad - B
        w_in = jnp.pad(w_in, ((0, pad), (0, 0)))
        x_in = jnp.pad(x_in, ((0, pad), (0, 0), (0, 0)))

    kernel = functools.partial(_mv_var_kernel, ppy=ppy, t=int(T), n=int(N))

    pv = pl.pallas_call(
        kernel,
        out_shape=jax.ShapeDtypeStruct((b_pad, 1), jnp.float32),
        grid_spec=pltpu.PrefetchScalarGridSpec(
            num_scalar_prefetch=0,
            grid=(num_tiles,),
            in_specs=[
                pl.BlockSpec((tb, N), lambda i: (i, 0)),
                pl.BlockSpec((tb, N, T), lambda i: (i, 0, 0)),
            ],
            # 2-D output: per-portfolio scalars share VMEM tiles instead of
            # each padding to a full (8,128) 4 KiB tile as (TB,1,1) would.
            out_specs=pl.BlockSpec((tb, 1), lambda i: (i, 0)),
        ),
        compiler_params=pltpu.CompilerParams(
            # Each grid step owns its output block -> the batch axis is
            # embarrassingly parallel.
            # TODO(synk): use pltpu.CORE_PARALLEL here on v7x so the batch
            #             loop splits across its two TensorCores.
            dimension_semantics=("parallel",),
            vmem_limit_bytes=int(vmem_limit),
        ),
    )(w_in, x_in)

    pv = pv[:B, 0]
    return jnp.mean(-(pr - ra * pv))


def _reference(returns, weights, batch_x, risk_aversion=1.0, ppy=252):
    B, N, T = batch_x.shape
    pr = jnp.sum(returns * weights, axis=1) * ppy
    mean = jnp.mean(batch_x, axis=2, keepdims=True)
    xc = batch_x - mean
    cov = jnp.einsum('bnt,bmt->bnm', xc, xc) / (T - 1) * ppy
    pv = jnp.einsum('bn,bnm,bm->b', weights, cov, weights)
    return jnp.mean(-(pr - risk_aversion * pv))


if __name__ == "__main__":
    key = jax.random.PRNGKey(0)
    k1, k2, k3 = jax.random.split(key, 3)
    B, N, T = 2, 4, 16

    returns = jax.random.normal(k1, (B, N), dtype=jnp.float32) * 0.01
    raw_w = jax.random.normal(k2, (B, N), dtype=jnp.float32)
    weights = jax.nn.softmax(raw_w, axis=1)
    batch_x = jax.random.normal(k3, (B, N, T), dtype=jnp.float32) * 0.02

    loss = mean_variance_loss(returns, weights, batch_x,
                              risk_aversion=1.0, periods_per_year=252)
    loss = jax.block_until_ready(loss)

    ref = _reference(returns, weights, batch_x, 1.0, 252)
    assert jnp.allclose(loss, ref, rtol=1e-4, atol=1e-5), (loss, ref)
    print("KERNEL_OK")
</pallas_src>

<mosaic_0001>
module attributes {stable_mosaic.version = 11 : i64} {
  func.func @_mv_var_kernel(%arg0: i32, %arg1: memref<2x4xf32, #tpu.memory_space<vmem>>, %arg2: memref<2x4x16xf32, #tpu.memory_space<vmem>>, %arg3: memref<2x1xf32, #tpu.memory_space<vmem>>) attributes {dimension_semantics = [#tpu.dimension_semantics<parallel>], iteration_bounds = array<i64: 1>, scalar_prefetch = 0 : i64, scratch_operands = 0 : i64, tpu.core_type = #tpu.core_type<tc>, window_params = [{transform_indices = @transform_0, window_bounds = array<i64: 2, 4>}, {transform_indices = @transform_1, window_bounds = array<i64: 2, 4, 16>}, {transform_indices = @transform_2, window_bounds = array<i64: 2, 1>}]} {
    %c0 = arith.constant 0 : index
    %c0_0 = arith.constant 0 : index
    %0 = vector.load %arg1[%c0, %c0_0] : memref<2x4xf32, #tpu.memory_space<vmem>>, vector<2x1xf32>
    %c0_1 = arith.constant 0 : index
    %c0_2 = arith.constant 0 : index
    %c0_3 = arith.constant 0 : index
    %1 = vector.load %arg2[%c0_1, %c0_2, %c0_3] : memref<2x4x16xf32, #tpu.memory_space<vmem>>, vector<2x1x16xf32>
    %2 = vector.shape_cast %1 : vector<2x1x16xf32> to vector<2x16xf32>
    %3 = vector.broadcast %0 : vector<2x1xf32> to vector<2x16xf32>
    %4 = arith.mulf %3, %2 : vector<2x16xf32>
    %c0_4 = arith.constant 0 : index
    %c1 = arith.constant 1 : index
    %5 = vector.load %arg1[%c0_4, %c1] : memref<2x4xf32, #tpu.memory_space<vmem>>, vector<2x1xf32>
    %c0_5 = arith.constant 0 : index
    %c1_6 = arith.constant 1 : index
    %c0_7 = arith.constant 0 : index
    %6 = vector.load %arg2[%c0_5, %c1_6, %c0_7] : memref<2x4x16xf32, #tpu.memory_space<vmem>>, vector<2x1x16xf32>
    %7 = vector.shape_cast %6 : vector<2x1x16xf32> to vector<2x16xf32>
    %8 = vector.broadcast %5 : vector<2x1xf32> to vector<2x16xf32>
    %9 = arith.mulf %8, %7 : vector<2x16xf32>
    %10 = arith.addf %4, %9 : vector<2x16xf32>
    %c0_8 = arith.constant 0 : index
    %c2 = arith.constant 2 : index
    %11 = vector.load %arg1[%c0_8, %c2] : memref<2x4xf32, #tpu.memory_space<vmem>>, vector<2x1xf32>
    %c0_9 = arith.constant 0 : index
    %c2_10 = arith.constant 2 : index
    %c0_11 = arith.constant 0 : index
    %12 = vector.load %arg2[%c0_9, %c2_10, %c0_11] : memref<2x4x16xf32, #tpu.memory_space<vmem>>, vector<2x1x16xf32>
    %13 = vector.shape_cast %12 : vector<2x1x16xf32> to vector<2x16xf32>
    %14 = vector.broadcast %11 : vector<2x1xf32> to vector<2x16xf32>
    %15 = arith.mulf %14, %13 : vector<2x16xf32>
    %16 = arith.addf %10, %15 : vector<2x16xf32>
    %c0_12 = arith.constant 0 : index
    %c3 = arith.constant 3 : index
    %17 = vector.load %arg1[%c0_12, %c3] : memref<2x4xf32, #tpu.memory_space<vmem>>, vector<2x1xf32>
    %c0_13 = arith.constant 0 : index
    %c3_14 = arith.constant 3 : index
    %c0_15 = arith.constant 0 : index
    %18 = vector.load %arg2[%c0_13, %c3_14, %c0_15] : memref<2x4x16xf32, #tpu.memory_space<vmem>>, vector<2x1x16xf32>
    %19 = vector.shape_cast %18 : vector<2x1x16xf32> to vector<2x16xf32>
    %20 = vector.broadcast %17 : vector<2x1xf32> to vector<2x16xf32>
    %21 = arith.mulf %20, %19 : vector<2x16xf32>
    %22 = arith.addf %16, %21 : vector<2x16xf32>
    %cst = arith.constant dense<0.000000e+00> : vector<2xf32>
    %23 = vector.multi_reduction <add>, %22, %cst [1] : vector<2x16xf32> to vector<2xf32>
    %24 = vector.shape_cast %23 : vector<2xf32> to vector<2x1xf32>
    %cst_16 = arith.constant 1.600000e+01 : f32
    %25 = vector.broadcast %cst_16 : f32 to vector<2x1xf32>
    %26 = arith.divf %24, %25 : vector<2x1xf32>
    %27 = vector.broadcast %26 : vector<2x1xf32> to vector<2x16xf32>
    %28 = arith.subf %22, %27 : vector<2x16xf32>
    %29 = arith.mulf %28, %28 : vector<2x16xf32>
    %cst_17 = arith.constant dense<0.000000e+00> : vector<2xf32>
    %30 = vector.multi_reduction <add>, %29, %cst_17 [1] : vector<2x16xf32> to vector<2xf32>
    %31 = vector.shape_cast %30 : vector<2xf32> to vector<2x1xf32>
    %cst_18 = arith.constant 1.680000e+01 : f32
    %32 = vector.broadcast %cst_18 : f32 to vector<2x1xf32>
    %33 = arith.mulf %31, %32 : vector<2x1xf32>
    %c0_19 = arith.constant 0 : index
    %c0_20 = arith.constant 0 : index
    %34 = vector.load %arg3[%c0_19, %c0_20] : memref<2x1xf32, #tpu.memory_space<vmem>>, vector<2x1xf32>
    tpu.vector_store %arg3[%c0_19, %c0_20], %33 {strides = array<i32>} : memref<2x1xf32, #tpu.memory_space<vmem>>, vector<2x1xf32>,
    return
  }
  func.func @transform_0(%arg0: i32) -> (i32, i32) {
    %c0_i32 = arith.constant 0 : i32
    %c0_i32_0 = arith.constant 0 : i32
    return %arg0, %c0_i32 : i32, i32
  }
  func.func @transform_1(%arg0: i32) -> (i32, i32, i32) {
    %c0_i32 = arith.constant 0 : i32
    %c0_i32_0 = arith.constant 0 : i32
    %c0_i32_1 = arith.constant 0 : i32
    return %arg0, %c0_i32, %c0_i32_0 : i32, i32, i32
  }
  func.func @transform_2(%arg0: i32) -> (i32, i32) {
    %c0_i32 = arith.constant 0 : i32
    %c0_i32_0 = arith.constant 0 : i32
    return %arg0, %c0_i32 : i32, i32
  }
}

</mosaic_0001>

<llo_original>
// kernel: tpu_custom_call.1
$region0: #{tpu_custom_call.1}
  #allocation0 [shape = 'u32[]', space=smem, size = 0x4, offset = 0x4, fixed_abs, tag = 'smem constant byte address 0x4 - core index']
  #allocation1 [shape = 'u32[144,128]{1,0:T(1,128)}', space=vmem, size = 0x12000, scoped, tag = 'internal scratch']
  %s0 = inlined_call_operand.hbm [shape: f32[2,4], index: 0, kind: input, shape index: {}]
  %s1 = inlined_call_operand.hbm [shape: f32[2,4,16], index: 1, kind: input, shape index: {}]
  %s2 = inlined_call_operand.vmem [shape: f32[2,1], index: 2, kind: output, shape index: {}]
  %s3 = sld [smem:[#allocation0]]
  $region26: #{tpu_custom_call.1} parent=0
    _
  %s5 = ssub.s32 1, %s3
  %s6 = scalar_select 0, %s5, %s3
  $region1: #{tpu_custom_call.1} parent=0
    #allocation2 [shape = 'u8[1024]{0}', space=vmem, size = 0x400, scoped, tag = 'input window, operand 0, single buffered']
    #allocation3 [shape = 's32[1]{0}', space=sflag, size = 0x4, scoped, tag = 'scoped memory for tpu_custom_call.1']
    #allocation4 [shape = 'u8[4096]{0}', space=vmem, size = 0x1000, scoped, tag = 'input window, operand 1, single buffered']
    #allocation5 [shape = 's32[1]{0}', space=sflag, size = 0x4, scoped, tag = 'scoped memory for tpu_custom_call.1']
    %7 = vsyncpa [#allocation3], 0
    %8 = vsyncpa [#allocation5], 0
    // Predicated region
    $region2: #{tpu_custom_call.1} parent=1 // pred_check
      _
    $region3: #{tpu_custom_call.1} parent=1 // pred_check_branch
      %10 = sbr.rel (0) target = $region5
    $region4: #{tpu_custom_call.1} parent=1 // pred_region
      %s12 = ssub.s32 32, 32
      %13 = vsyncadd [#allocation3], %s12
      %s15 = sshll.u32 [#allocation2], 4
      %s16 = int_to_ptr.vmem [resolvable:$true] %s15
      %18 = dma.hbm_to_vmem [thread:$0]  %s0, 32, %s16, [#allocation3]
    $region5: #{tpu_custom_call.1} parent=1 // pred_fallthru
      _
    // Predicated region
    $region6: #{tpu_custom_call.1} parent=1 // pred_check
      _
    $region7: #{tpu_custom_call.1} parent=1 // pred_check_branch
      %20 = sbr.rel (0) target = $region9
    $region8: #{tpu_custom_call.1} parent=1 // pred_region
      %s22 = ssub.s32 128, 128
      %23 = vsyncadd [#allocation5], %s22
      %s24 = sshll.u32 [#allocation4], 4
      %s25 = int_to_ptr.vmem [resolvable:$true] %s24
      %30 = dma.hbm_to_vmem [thread:$0]  %s1, 128, %s25, [#allocation5], 64, 64, 4
    $region9: #{tpu_custom_call.1} parent=1 // pred_fallthru
      _
    // Predicated region
    $region10: #{tpu_custom_call.1} parent=1 // pred_check
      _
    $region11: #{tpu_custom_call.1} parent=1 // pred_check_branch
      %32 = sbr.rel (0) target = $region13
    $region12: #{tpu_custom_call.1} parent=1 // pred_region
      %33 = dma.done [#allocation3], 32
    $region13: #{tpu_custom_call.1} parent=1 // pred_fallthru
      _
    // Predicated region
    $region14: #{tpu_custom_call.1} parent=1 // pred_check
      _
    $region15: #{tpu_custom_call.1} parent=1 // pred_check_branch
      %35 = sbr.rel (0) target = $region17
    $region16: #{tpu_custom_call.1} parent=1 // pred_region
      %36 = dma.done [#allocation5], 128
    $region17: #{tpu_custom_call.1} parent=1 // pred_fallthru
      _
    %v37 = vld [vmem:[#allocation2] sm:$0x3]
    %v38 = vld [vmem:[#allocation4] sm:$0x1]
    %v39 = vld [vmem:[#allocation4 + $0x4] sm:$0x1]
    %41 = vset.pattern.permute.xlu0 0
    %42 = vperm.xlu0 %41, %v37
    %v43 = vpop.permute.xlu0 %42
    %v47 = vrot.slane %v39, 7
    %vm48 = vcmask 1041409
    %v49 = vsel %vm48, %v47, %v38
    %v51 = vmul.f32 %v43, %v49
    %v52 = vld [vmem:[#allocation4 + $0x1] sm:$0x1]
    %v53 = vld [vmem:[#allocation4 + $0x5] sm:$0x1]
    %54 = vset.pattern.permute.xlu0 1
    %55 = vperm.xlu0 %54, %v37
    %v56 = vpop.permute.xlu0 %55
    %v60 = vrot.slane %v53, 7
    %v61 = vsel %vm48, %v60, %v52
    %v63 = vmul.f32 %v56, %v61
    %v64 = vadd.f32 %v51, %v63
    %v65 = vld [vmem:[#allocation4 + $0x2] sm:$0x1]
    %v66 = vld [vmem:[#allocation4 + $0x6] sm:$0x1]
    %67 = vset.pattern.permute.xlu0 2
    %68 = vperm.xlu0 %67, %v37
    %v69 = vpop.permute.xlu0 %68
    %v73 = vrot.slane %v66, 7
    %v74 = vsel %vm48, %v73, %v65
    %v76 = vmul.f32 %v69, %v74
    %v77 = vadd.f32 %v64, %v76
    %v78 = vld [vmem:[#allocation4 + $0x3] sm:$0x1]
    %v79 = vld [vmem:[#allocation4 + $0x7] sm:$0x1]
    %80 = vset.pattern.permute.xlu0 3
    %81 = vperm.xlu0 %80, %v37
    %v82 = vpop.permute.xlu0 %81
    %v86 = vrot.slane %v79, 7
    %v87 = vsel %vm48, %v86, %v78
    %v89 = vmul.f32 %v82, %v87
    %v90 = vadd.f32 %v77, %v89
    %vm91 = vcmask 123904
    %v92 = vsel %vm91, %v90, 0.0
    %93 = vadd.xlane.f32.xlu0 %v92
    %v94 = vpop.xlane.xlu0 %93
    %v95 = vrcp.pop 16.0
    %v96 = vmul.f32 %v94, %v95
    %v97 = vsub.f32 %v90, %v96
    %v98 = vmul.f32 %v97, %v97
    %v99 = vsel %vm91, %v98, 0.0
    %100 = vadd.xlane.f32.xlu0 %v99
    %v101 = vpop.xlane.xlu0 %100
    %v102 = vmul.f32 %v101, 16.8
    %vm103 = vcmask 1024
    %104 = vst.msk [vmem:[%s2] sm:$0x3] %vm103, %v102
    // Predicated region
    $region18: #{tpu_custom_call.1} parent=1 // pred_check
      _
    $region19: #{tpu_custom_call.1} parent=1 // pred_check_branch
      %106 = sbr.rel (0) target = $region21
    $region20: #{tpu_custom_call.1} parent=1 // pred_region
      _
    $region21: #{tpu_custom_call.1} parent=1 // pred_fallthru
      _
    // Predicated region
    $region22: #{tpu_custom_call.1} parent=1 // pred_check
      _
    $region23: #{tpu_custom_call.1} parent=1 // pred_check_branch
      %108 = sbr.rel (0) target = $region25
    $region24: #{tpu_custom_call.1} parent=1 // pred_region
      _
    $region25: #{tpu_custom_call.1} parent=1 // pred_fallthru
      _
    %109 = vsyncpa [#allocation3], 1
    %110 = vsyncpa [#allocation5], 1

</llo_original>
